<compile_context>
chip_gen: v5e
topology: v5e:2x2
jax: 0.10.0
libtpu: 0.0.40
codegen_flags: <defaults>
</compile_context>

<pallas_src>
import functools
import math

import jax
import jax.numpy as jnp
from jax.experimental import pallas as pl
from jax.experimental.pallas import tpu as pltpu

# --------------------------------------------------------------------------
# Small-shape hyperparameters (spatial sizes scaled down; channel sizes are
# exactly the ones defined in the module's __init__).
# --------------------------------------------------------------------------
N_POINTS = 128            # input points per cloud (orig: 1024)
UMB_K = 9                 # umbrella kNN size (as in module)
SA1_NPOINT, SA1_RADIUS, SA1_NSAMPLE = 32, 0.2, 16    # orig: 512, 0.2, 32
SA2_NPOINT, SA2_RADIUS, SA2_NSAMPLE = 8, 0.4, 16     # orig: 128, 0.4, 64
N_CLASSES = 9
LANE = 128                # TPU lane width; pad narrow outputs to this


# ==========================================================================
# Tiling helpers
# ==========================================================================
def _pick_tile(m, max_tile=256):
    """Largest multiple-of-8 divisor of m (<= max_tile), preferring a choice that
    leaves >= 2 grid steps so both v7x TensorCores get work.  Falls back to m
    itself (full-extent block, always layout-legal)."""
    best = None
    for t in range(8, min(m, max_tile) + 1, 8):
        if m % t == 0 and (m // t >= 2 or best is None):
            best = t
    if best is None:
        best = m
    assert m % best == 0
    return best


def _maybe_vmem_limit(est_bytes):
    """Bump the scoped-VMEM limit only when the (double-buffered) working set
    approaches the conservative defaults (16 MiB v5e / 32 MiB v6e+v7x); keep the
    cap well under v7x's 64 MiB physical VMEM."""
    if est_bytes <= 12 * 1024 * 1024:
        return None
    return min(int(est_bytes * 1.25), 56 * 1024 * 1024)


# ==========================================================================
# Pallas kernels (hot path)
# ==========================================================================
def _fused_mlp_pool_kernel(x_ref, w0_ref, b0_ref, w1_ref, b1_ref, w2_ref, b2_ref,
                           o_ref, acc_ref):
    """3x (matmul + bias + ReLU) on one nsample-chunk of every output point in the
    row tile, followed by a running max into the f32 accumulator.  The pre-pool
    activations never exceed [tm*chunk, Cout] live f32.  bf16 MXU inputs (cast
    in-kernel), f32 accumulation/epilogue."""
    j = pl.program_id(1)

    @pl.when(j == 0)
    def _():
        acc_ref[...] = jnp.full(acc_ref.shape, -jnp.inf, acc_ref.dtype)

    tm, chunk_ns, cin = x_ref.shape
    x = x_ref[...].reshape(tm * chunk_ns, cin).astype(jnp.bfloat16)
    h = jnp.dot(x, w0_ref[...], preferred_element_type=jnp.float32)
    h = jnp.maximum(h + b0_ref[...], 0.0)
    h = jnp.dot(h.astype(jnp.bfloat16), w1_ref[...],
                preferred_element_type=jnp.float32)
    h = jnp.maximum(h + b1_ref[...], 0.0)
    h = jnp.dot(h.astype(jnp.bfloat16), w2_ref[...],
                preferred_element_type=jnp.float32)
    h = jnp.maximum(h + b2_ref[...], 0.0)
    cout = h.shape[-1]
    # chunk_ns % 8 == 0 and cout % 128 == 0 -> tile-aligned reshape (no repack)
    acc_ref[...] = jnp.maximum(acc_ref[...],
                               jnp.max(h.reshape(tm, chunk_ns, cout), axis=1))

    @pl.when(j == pl.num_programs(1) - 1)
    def _():
        o_ref[...] = acc_ref[...].astype(o_ref.dtype)


def fused_mlp_pool(layers, x, *, pool_ns, out_dtype=jnp.bfloat16, max_tile=256):
    """x: [rows, Cin] (point-major: all pool_ns samples of a point contiguous).
    Runs the fused 3-layer MLP and max-pools over the nsample axis to
    [rows // pool_ns, Cout].  The bf16 cast happens inside the kernel."""
    rows, cin = x.shape
    assert rows % pool_ns == 0 and pool_ns % 8 == 0, "nsample must be 8-aligned"
    m_out = rows // pool_ns
    (w0, b0), (w1, b1), (w2, b2) = layers
    cout = w2.shape[1]
    tm = _pick_tile(m_out, max_tile)
    chunk_ns = 8 if pool_ns > 8 else pool_ns          # chunked pool (8 rows/point/step)
    assert pool_ns % chunk_ns == 0

    x3 = x.reshape(m_out, pool_ns, cin)               # free metadata reshape

    weight_bytes = sum(int(w.size) * 2 + int(b.size) * 4 for w, b in layers)
    c_max = max(w0.shape[1], w1.shape[1], cout)
    est = (2 * tm * chunk_ns * cin * x.dtype.itemsize           # input blocks (2-buf)
           + 2 * weight_bytes                                   # weights (2-buf)
           + 2 * tm * cout * jnp.dtype(out_dtype).itemsize      # output blocks
           + tm * cout * 4                                      # accumulator scratch
           + 2 * tm * chunk_ns * c_max * 4)                     # live activations

    return pl.pallas_call(
        _fused_mlp_pool_kernel,
        out_shape=jax.ShapeDtypeStruct((m_out, cout), out_dtype),
        grid=(m_out // tm, pool_ns // chunk_ns),
        in_specs=[
            pl.BlockSpec((tm, chunk_ns, cin), lambda i, j: (i, j, 0)),
            # Constant-index weight/bias blocks stay VMEM-resident across the grid.
            pl.BlockSpec(w0.shape, lambda i, j: (0, 0)),
            pl.BlockSpec((1, w0.shape[1]), lambda i, j: (0, 0)),
            pl.BlockSpec(w1.shape, lambda i, j: (0, 0)),
            pl.BlockSpec((1, w1.shape[1]), lambda i, j: (0, 0)),
            pl.BlockSpec(w2.shape, lambda i, j: (0, 0)),
            pl.BlockSpec((1, w2.shape[1]), lambda i, j: (0, 0)),
        ],
        out_specs=pl.BlockSpec((tm, cout), lambda i, j: (i, 0)),
        scratch_shapes=[pltpu.VMEM((tm, cout), jnp.float32)],
        compiler_params=pltpu.CompilerParams(
            dimension_semantics=("parallel", "arbitrary"),
            vmem_limit_bytes=_maybe_vmem_limit(est)),
    )(x3, w0, b0, w1, b1, w2, b2)


def _umbrella_kernel(x_ref, w1_ref, b1_ref, w2_ref, b2_ref, o_ref):
    """Packed umbrella MLP: x [tm, G*10] -> relu(x @ blkdiag(w1) + b1_tiled)
    @ tile(w2 | 0-pad to 128 lanes) + (G*b2 | 0)  ==  sum_g( relu(x_g@w1+b1)@w2 + b2 )
    written lane-dense (128 wide)."""
    x = x_ref[...].astype(jnp.bfloat16)               # cast in-kernel (hidden under MXU)
    h = jnp.dot(x, w1_ref[...], preferred_element_type=jnp.float32)
    h = jnp.maximum(h + b1_ref[...], 0.0)
    o = jnp.dot(h.astype(jnp.bfloat16), w2_ref[...],
                preferred_element_type=jnp.float32)
    o_ref[...] = (o + b2_ref[...]).astype(o_ref.dtype)


def umbrella_mlp_sum(p, feat):
    """feat: [B, N, G, 10] f32 -> [B, N, 10] bf16: fused (conv+BN+ReLU, conv) + sum
    over the G umbrella groups (G packed into lanes, K=G*10)."""
    B, N, G, C = feat.shape
    M = B * N
    x = feat.reshape(M, G * C)                        # f32; bf16 cast happens in-kernel
    tm = _pick_tile(M)
    out = pl.pallas_call(
        _umbrella_kernel,
        out_shape=jax.ShapeDtypeStruct((M, LANE), jnp.bfloat16),   # lane-dense store
        grid=(M // tm,),
        in_specs=[
            pl.BlockSpec((tm, G * C), lambda i: (i, 0)),
            pl.BlockSpec(p["w1_bd"].shape, lambda i: (0, 0)),
            pl.BlockSpec((1, G * C), lambda i: (0, 0)),
            pl.BlockSpec(p["w2_t"].shape, lambda i: (0, 0)),
            pl.BlockSpec((1, LANE), lambda i: (0, 0)),
        ],
        out_specs=pl.BlockSpec((tm, LANE), lambda i: (i, 0)),
        compiler_params=pltpu.CompilerParams(dimension_semantics=("parallel",)),
    )(x, p["w1_bd"], p["b1_t"], p["w2_t"], p["b2_e"])
    return out[:, :C].reshape(B, N, C)                # drop lane padding (trivial slice)


def _sa3_cls_kernel(x_ref, sw0, sb0, sw1, sb1, sw2, sb2,
                    cw0, cb0, cw1, cb1, cw2, cb2,
                    feat_ref, logit_ref, *, pool_ns):
    """SA3 (group_all) fused MLP + nsample max-pool + full 3-layer classifier in a
    single pallas_call; the pooled [B,1024] feature never round-trips to HBM
    before the classifier.  Logits are written lane-dense (128 wide, zero-padded
    weights)."""
    x = x_ref[...].astype(jnp.bfloat16)
    h = jnp.dot(x, sw0[...], preferred_element_type=jnp.float32)
    h = jnp.maximum(h + sb0[...], 0.0)
    h = jnp.dot(h.astype(jnp.bfloat16), sw1[...], preferred_element_type=jnp.float32)
    h = jnp.maximum(h + sb1[...], 0.0)
    h = jnp.dot(h.astype(jnp.bfloat16), sw2[...], preferred_element_type=jnp.float32)
    h = jnp.maximum(h + sb2[...], 0.0)
    rows, cfeat = h.shape
    f = jnp.max(h.reshape(rows // pool_ns, pool_ns, cfeat), axis=1)   # [B, 1024] f32
    feat_ref[...] = f.astype(feat_ref.dtype)
    # Classifier: Linear+BN+ReLU, Linear+BN+ReLU, Linear (Dropout = identity in eval).
    g = jnp.dot(f.astype(jnp.bfloat16), cw0[...], preferred_element_type=jnp.float32)
    g = jnp.maximum(g + cb0[...], 0.0)
    g = jnp.dot(g.astype(jnp.bfloat16), cw1[...], preferred_element_type=jnp.float32)
    g = jnp.maximum(g + cb1[...], 0.0)
    g = jnp.dot(g.astype(jnp.bfloat16), cw2[...], preferred_element_type=jnp.float32)
    logit_ref[...] = (g + cb2[...]).astype(logit_ref.dtype)


def sa3_classifier_fused(sa3_layers, cls_layers, x, *, pool_ns, n_classes):
    rows, cin = x.shape
    assert rows % pool_ns == 0
    m_out = rows // pool_ns
    cfeat = sa3_layers[2][0].shape[1]        # 1024
    ncls_pad = cls_layers[2][0].shape[1]     # 128 (lane-dense padded logits)

    flat_args = []
    in_specs = [pl.BlockSpec((rows, cin), lambda i: (0, 0))]
    for w, b in (*sa3_layers, *cls_layers):
        flat_args += [w, b]
        in_specs.append(pl.BlockSpec(w.shape, lambda i: (0, 0)))
        in_specs.append(pl.BlockSpec((1, int(w.shape[1])), lambda i: (0, 0)))

    weight_bytes = sum(int(w.size) * 2 + int(b.size) * 4
                       for w, b in (*sa3_layers, *cls_layers))
    est = (2 * (rows * cin * x.dtype.itemsize + weight_bytes
                + m_out * (cfeat + ncls_pad) * 4)
           + 2 * rows * cfeat * 4)

    feat, logits = pl.pallas_call(
        functools.partial(_sa3_cls_kernel, pool_ns=pool_ns),
        out_shape=(jax.ShapeDtypeStruct((m_out, cfeat), jnp.float32),
                   jax.ShapeDtypeStruct((m_out, ncls_pad), jnp.float32)),
        grid=(1,),
        in_specs=in_specs,
        out_specs=(pl.BlockSpec((m_out, cfeat), lambda i: (0, 0)),
                   pl.BlockSpec((m_out, ncls_pad), lambda i: (0, 0))),
        compiler_params=pltpu.CompilerParams(
            dimension_semantics=("arbitrary",),
            vmem_limit_bytes=_maybe_vmem_limit(est)),
    )(x, *flat_args)
    return feat, logits[:, :n_classes]


# ==========================================================================
# Geometry helpers (plain JAX glue)
# ==========================================================================
def square_distance(src, dst):
    return jnp.sum((src[:, :, None, :] - dst[:, None, :, :]) ** 2, axis=-1)


def index_points(points, idx):
    B = points.shape[0]
    batch = jnp.arange(B).reshape((B,) + (1,) * (idx.ndim - 1))
    return points[batch, idx]


def xyz2sphere(xyz, normalize=True):
    rho = jnp.sqrt(jnp.sum(xyz ** 2, axis=-1, keepdims=True))
    rho = jnp.maximum(rho, 0.0)
    safe_rho = jnp.where(rho == 0, 1.0, rho)
    theta = jnp.arccos(jnp.clip(xyz[..., 2:3] / safe_rho, -1.0, 1.0))
    theta = jnp.where(rho == 0, 0.0, theta)
    phi = jnp.arctan2(xyz[..., 1:2], xyz[..., 0:1])
    if normalize:
        theta = theta / jnp.pi
        phi = phi / (2.0 * jnp.pi) + 0.5
    return jnp.concatenate([rho, theta, phi], axis=-1)


def farthest_point_sample(xyz, npoint):
    B, N, _ = xyz.shape
    # TODO(synk): original FPS starts from a random point; fixed to index 0 for determinism.
    def body(i, state):
        distance, farthest, centroids = state
        centroids = centroids.at[:, i].set(farthest)
        centroid = xyz[jnp.arange(B), farthest][:, None, :]          # [B,1,3]
        dist = jnp.sum((xyz - centroid) ** 2, axis=-1)
        distance = jnp.minimum(distance, dist)
        farthest = jnp.argmax(distance, axis=-1).astype(jnp.int32)
        return distance, farthest, centroids

    state = (jnp.full((B, N), 1e10, jnp.float32),
             jnp.zeros((B,), jnp.int32),
             jnp.zeros((B, npoint), jnp.int32))
    _, _, centroids = jax.lax.fori_loop(0, npoint, body, state)
    return centroids


def query_ball_point(radius, nsample, xyz, new_xyz):
    B, N, _ = xyz.shape
    S = new_xyz.shape[1]
    sqrdists = square_distance(new_xyz, xyz)                          # [B,S,N]
    group_idx = jnp.broadcast_to(jnp.arange(N, dtype=jnp.int32), (B, S, N))
    group_idx = jnp.where(sqrdists > radius ** 2, N, group_idx)
    group_idx = jnp.sort(group_idx, axis=-1)[:, :, :nsample]
    group_first = jnp.broadcast_to(group_idx[:, :, :1], (B, S, nsample))
    return jnp.where(group_idx == N, group_first, group_idx)


def group_by_umbrella(xyz, new_xyz, k=9):
    sqrdists = square_distance(new_xyz, xyz)
    knn_idx = jnp.argsort(sqrdists, axis=-1)[..., :k]                 # [B,N,k]
    group_xyz = index_points(xyz, knn_idx)[:, :, 1:]                  # drop self
    group_xyz_norm = group_xyz - new_xyz[:, :, None, :]
    group_phi = xyz2sphere(group_xyz_norm)[..., 2]                    # [B,N,k-1]
    sort_idx = jnp.argsort(group_phi, axis=-1)
    sort_idx_full = jnp.broadcast_to(sort_idx[..., None], group_xyz_norm.shape)
    sorted_xyz = jnp.take_along_axis(group_xyz_norm, sort_idx_full, axis=2)[..., None, :]
    rolled = jnp.roll(sorted_xyz, -1, axis=2)
    centroid = jnp.zeros_like(sorted_xyz)
    return jnp.concatenate([centroid, sorted_xyz, rolled], axis=-2)   # [B,N,k-1,3,3]


def cal_normal(group_xyz, key, random_inv=True):
    edge1 = group_xyz[..., 1, :] - group_xyz[..., 0, :]
    edge2 = group_xyz[..., 2, :] - group_xyz[..., 0, :]
    nor = jnp.cross(edge1, edge2)
    unit_nor = nor / jnp.linalg.norm(nor, axis=-1, keepdims=True)
    pos_mask = (unit_nor[..., 0, 0] > 0).astype(jnp.float32) * 2.0 - 1.0   # [B,N]
    unit_nor = unit_nor * pos_mask[..., None, None]
    if random_inv:
        # TODO(synk): original uses torch.randint per batch; deterministic fixed-key draw here.
        rand_mask = (jax.random.randint(key, (group_xyz.shape[0], 1, 1, 1), 0, 2)
                     .astype(jnp.float32) * 2.0 - 1.0)
        unit_nor = unit_nor * rand_mask
    return unit_nor


def cal_const(normal, center):
    return jnp.sum(normal * center, axis=-1, keepdims=True) / jnp.sqrt(3.0)


def check_nan_umb(normal, center, pos):
    B, N, G, _ = normal.shape
    mask = jnp.any(jnp.isnan(normal), axis=-1)                        # [B,N,G]
    first = jnp.argmax((~mask).astype(jnp.int32), axis=-1)            # [B,N]

    def pick_first(x):
        idx = jnp.broadcast_to(first[..., None, None], (B, N, 1, x.shape[-1]))
        return jnp.take_along_axis(x, idx, axis=2)

    normal = jnp.where(mask[..., None], pick_first(normal), normal)
    center = jnp.where(mask[..., None], pick_first(center), center)
    pos = jnp.where(mask[..., None], pick_first(pos), pos)
    return normal, center, pos


# ==========================================================================
# Model blocks
# ==========================================================================
def umbrella_surface_constructor(p, center, key, k=UMB_K):
    group_xyz = group_by_umbrella(center, center, k=k)                # [B,N,k-1,3,3]
    group_normal = cal_normal(group_xyz, key, random_inv=True)        # [B,N,k-1,3]
    group_center = jnp.mean(group_xyz, axis=-2)                       # [B,N,k-1,3]
    group_polar = xyz2sphere(group_center)                            # [B,N,k-1,3]
    group_pos = cal_const(group_normal, group_center)                 # [B,N,k-1,1]
    group_normal, group_center, group_pos = check_nan_umb(group_normal, group_center, group_pos)
    feat = jnp.concatenate([group_center, group_polar, group_normal, group_pos], axis=-1)
    return umbrella_mlp_sum(p, feat)                                  # aggr_type=sum


def surface_abstraction_cd(p, center, normal, feature, *, npoint, radius, nsample,
                           return_polar=True):
    fps_idx = farthest_point_sample(center, npoint)
    new_center = index_points(center, fps_idx)
    new_normal = index_points(normal, fps_idx)
    idx = query_ball_point(radius, nsample, center, new_center)
    group_center = index_points(center, idx)
    group_center_norm = group_center - new_center[:, :, None, :]
    group_normal = index_points(normal, idx)
    if return_polar:
        group_center_norm = jnp.concatenate(
            [group_center_norm, xyz2sphere(group_center_norm)], axis=-1)
    # Assemble the kernel input directly in bf16: the casts fuse into the
    # gather/elementwise producers (no standalone convert round trip) and halve
    # the concat's HBM footprint; the kernel accumulates in f32 anyway.
    parts = [group_center_norm.astype(jnp.bfloat16), group_normal.astype(jnp.bfloat16)]
    if feature is not None:
        parts.append(index_points(feature, idx).astype(jnp.bfloat16))
    new_feature = jnp.concatenate(parts, axis=-1)

    Bq, S, ns, C = new_feature.shape
    # Fused: (mlp_l0|mlp_f0 + BN + ReLU), mlp[1:], and the chunked nsample max-pool.
    x = new_feature.reshape(Bq * S * ns, C)
    feat_out = fused_mlp_pool(p["layers"], x, pool_ns=ns, out_dtype=jnp.bfloat16)
    return new_center, new_normal, feat_out.reshape(Bq, S, -1)


def sa3_and_classifier(p_sa3, p_cls, center, normal, feature, n_classes):
    """group_all SurfaceAbstractionCD + classifier, fused into one pallas_call."""
    group_center = center[:, None, :, :]                              # [B,1,N,3]
    group_center = jnp.concatenate([group_center, xyz2sphere(group_center)], axis=-1)
    parts = [group_center.astype(jnp.bfloat16),
             normal[:, None, :, :].astype(jnp.bfloat16),
             feature[:, None, :, :].astype(jnp.bfloat16)]
    new_feature = jnp.concatenate(parts, axis=-1)                     # [B,1,N,272]
    Bq, S, ns, C = new_feature.shape
    x = new_feature.reshape(Bq * S * ns, C)
    feat, logits = sa3_classifier_fused(p_sa3["layers"], p_cls["layers"], x,
                                        pool_ns=ns, n_classes=n_classes)
    return feat.reshape(Bq * S, -1), logits


def repsurface_forward(params, points, aug_key, return_type="softmax"):
    """points: [B, C>=3, N] (PyTorch layout); only xyz rows are used."""
    center = jnp.transpose(points[:, :3, :], (0, 2, 1))               # [B,N,3]
    normal = umbrella_surface_constructor(params["umb"], center, aug_key)
    center, normal, feature = surface_abstraction_cd(
        params["sa1"], center, normal, None,
        npoint=SA1_NPOINT, radius=SA1_RADIUS, nsample=SA1_NSAMPLE)
    center, normal, feature = surface_abstraction_cd(
        params["sa2"], center, normal, feature,
        npoint=SA2_NPOINT, radius=SA2_RADIUS, nsample=SA2_NSAMPLE)
    feature, logits = sa3_and_classifier(
        params["sa3"], params["cls"], center, normal, feature, N_CLASSES)
    if return_type == "logsoftmax":
        return jax.nn.log_softmax(logits, axis=-1), feature
    elif return_type == "logits":
        return logits, feature
    else:
        # NB: the reference module softmaxes the *feature* (not logits) here.
        return jax.nn.softmax(feature, axis=1), feature


# ==========================================================================
# Deterministic parameter init (PyTorch-default shapes; BN folded, eval mode)
# ==========================================================================
def fold_bn(w, b, eps=1e-5):
    # TODO(synk): BatchNorm uses eval-mode running stats (PyTorch init: gamma=1,
    # beta=0, mean=0, var=1) folded into the matmul; train-mode batch stats not modeled.
    c_out = w.shape[1]
    gamma = jnp.ones((c_out,), jnp.float32)
    beta = jnp.zeros((c_out,), jnp.float32)
    mean = jnp.zeros((c_out,), jnp.float32)
    var = jnp.ones((c_out,), jnp.float32)
    s = gamma / jnp.sqrt(var + eps)
    return w * s[None, :], (b - mean) * s + beta


def _bf16(w):
    return w.astype(jnp.bfloat16)


def init_params(key):
    keys = iter(jax.random.split(key, 24))

    def dense(cin, cout):
        k1, k2 = jax.random.split(next(keys))
        bound = 1.0 / math.sqrt(cin)
        w = jax.random.uniform(k1, (cin, cout), jnp.float32, -bound, bound)
        b = jax.random.uniform(k2, (cout,), jnp.float32, -bound, bound)
        return w, b

    params = {}
    # UmbrellaSurfaceConstructor: Conv2d(10,10,1)+BN+ReLU + Conv2d(10,10,1), sum over G.
    # Packed form: block-diagonal first layer over the G umbrella groups (K=G*10),
    # group-sum folded into a tiled second layer, zero-padded to a 128-lane output.
    w1, b1 = fold_bn(*dense(10, 10))
    w2, b2 = dense(10, 10)
    G = UMB_K - 1
    w2_t = jnp.zeros((G * 10, LANE), jnp.float32).at[:, :10].set(jnp.tile(w2, (G, 1)))
    b2_e = jnp.zeros((1, LANE), jnp.float32).at[0, :10].set(float(G) * b2)
    params["umb"] = {
        "w1_bd": _bf16(jnp.kron(jnp.eye(G, dtype=jnp.float32), w1)),   # [G*10, G*10]
        "b1_t": jnp.tile(b1, (G,)).reshape(1, G * 10),                 # f32
        "w2_t": _bf16(w2_t),                                           # [G*10, 128]
        "b2_e": b2_e,                                                  # (1, 128) f32
    }

    def sa(pos_c, feat_c, mlp):
        wl, bl = fold_bn(*dense(pos_c, mlp[0]))
        wf, bf = fold_bn(*dense(feat_c, mlp[0]))
        w0 = jnp.concatenate([wl, wf], axis=0)      # fused loc+feat 1x1 conv
        b0 = bl + bf
        layers = [(_bf16(w0), b0.reshape(1, -1))]
        last = mlp[0]
        for out in mlp[1:]:
            w, b = fold_bn(*dense(last, out))
            layers.append((_bf16(w), b.reshape(1, -1)))
            last = out
        return {"layers": tuple(layers)}

    params["sa1"] = sa(6, 10, [64, 64, 128])
    params["sa2"] = sa(6, 128 + 10, [128, 128, 256])
    params["sa3"] = sa(6, 256 + 10, [256, 512, 1024])

    # Classifier: 1024->512 (BN,ReLU) -> 512->256 (BN,ReLU) -> 256->9; last layer
    # zero-padded to 128 output lanes (lane-dense store, sliced in the wrapper).
    cw1, cb1 = fold_bn(*dense(1024, 512))
    cw2, cb2 = fold_bn(*dense(512, 256))
    cw3, cb3 = dense(256, N_CLASSES)
    cw3p = jnp.zeros((256, LANE), jnp.float32).at[:, :N_CLASSES].set(cw3)
    cb3p = jnp.zeros((1, LANE), jnp.float32).at[0, :N_CLASSES].set(cb3)
    params["cls"] = {"layers": (
        (_bf16(cw1), cb1.reshape(1, -1)),
        (_bf16(cw2), cb2.reshape(1, -1)),
        (_bf16(cw3p), cb3p),
    )}
    return params


# ==========================================================================
# Pure-JAX references for the fused kernels (correctness checks)
# ==========================================================================
def _ref_mlp_pool(layers, x, pool_ns):
    h = x.astype(jnp.bfloat16)
    n = len(layers)
    for i, (w, b) in enumerate(layers):
        h = jnp.dot(h, w, preferred_element_type=jnp.float32) + b
        h = jnp.maximum(h, 0.0)
        if i < n - 1:
            h = h.astype(jnp.bfloat16)
    m, c = h.shape[0] // pool_ns, h.shape[1]
    return jnp.max(h.reshape(m, pool_ns, c), axis=1)


def _ref_umbrella(p, feat):
    G = feat.shape[2]
    w1 = p["w1_bd"][:10, :10]
    b1 = p["b1_t"][0, :10]
    w2 = p["w2_t"][:10, :10]
    b2 = p["b2_e"][0, :10] / G
    out = 0.0
    for g in range(G):
        h = jnp.dot(feat[:, :, g, :].astype(jnp.bfloat16), w1,
                    preferred_element_type=jnp.float32) + b1
        h = jnp.maximum(h, 0.0)
        out = out + jnp.dot(h.astype(jnp.bfloat16), w2,
                            preferred_element_type=jnp.float32) + b2
    return out


# ==========================================================================
if __name__ == "__main__":
    root = jax.random.PRNGKey(0)
    k_param, k_data, k_aug = jax.random.split(root, 3)

    B = 2
    params = init_params(k_param)
    points = jax.random.uniform(k_data, (B, 3, N_POINTS), dtype=jnp.float32)

    # --- fused-kernel correctness checks against plain-JAX references --------
    kt1, kt2 = jax.random.split(jax.random.PRNGKey(1))
    xt = jax.random.normal(kt1, (16 * 16, 16), jnp.float32) * 0.5
    got = fused_mlp_pool(params["sa1"]["layers"], xt.astype(jnp.bfloat16),
                         pool_ns=16, out_dtype=jnp.float32)
    want = _ref_mlp_pool(params["sa1"]["layers"], xt, 16)
    assert bool(jnp.allclose(got, want, atol=3e-2, rtol=3e-2)), "fused_mlp_pool mismatch"

    ft = jax.random.normal(kt2, (1, 32, UMB_K - 1, 10), jnp.float32) * 0.5
    got_u = umbrella_mlp_sum(params["umb"], ft).astype(jnp.float32)
    want_u = _ref_umbrella(params["umb"], ft)
    assert bool(jnp.allclose(got_u, want_u, atol=3e-2, rtol=3e-2)), "umbrella mismatch"

    # --- end-to-end forward ---------------------------------------------------
    fwd = jax.jit(repsurface_forward, static_argnames=("return_type",))

    # Default module path: (softmax(feature), feature)
    probs, feature = fwd(params, points, k_aug)
    # Also exercise the logits path (classifier runs fused with SA3 either way).
    logits, _ = fwd(params, points, k_aug, return_type="logits")
    jax.block_until_ready((probs, feature, logits))

    assert probs.shape == (B, 1024) and feature.shape == (B, 1024)
    assert logits.shape == (B, N_CLASSES)
    assert bool(jnp.all(jnp.isfinite(probs))) and bool(jnp.all(jnp.isfinite(feature)))
    assert bool(jnp.all(jnp.isfinite(logits)))
    print("KERNEL_OK")
</pallas_src>

<mosaic_0001>
module attributes {stable_mosaic.version = 11 : i64} {
  func.func @_fused_mlp_pool_kernel(%arg0: i32, %arg1: i32, %arg2: memref<8x8x16xbf16, #tpu.memory_space<vmem>>, %arg3: memref<16x64xbf16, #tpu.memory_space<vmem>>, %arg4: memref<1x64xf32, #tpu.memory_space<vmem>>, %arg5: memref<64x64xbf16, #tpu.memory_space<vmem>>, %arg6: memref<1x64xf32, #tpu.memory_space<vmem>>, %arg7: memref<64x128xbf16, #tpu.memory_space<vmem>>, %arg8: memref<1x128xf32, #tpu.memory_space<vmem>>, %arg9: memref<8x128xf32, #tpu.memory_space<vmem>>, %arg10: memref<8x128xf32, #tpu.memory_space<vmem>>) attributes {dimension_semantics = [#tpu.dimension_semantics<parallel>, #tpu.dimension_semantics<arbitrary>], iteration_bounds = array<i64: 2, 2>, scalar_prefetch = 0 : i64, scratch_operands = 1 : i64, tpu.core_type = #tpu.core_type<tc>, window_params = [{transform_indices = @transform_0, window_bounds = array<i64: 8, 8, 16>}, {pipeline_mode = #tpu.pipeline_mode<synchronous>, transform_indices = @transform_1, window_bounds = array<i64: 16, 64>}, {pipeline_mode = #tpu.pipeline_mode<synchronous>, transform_indices = @transform_2, window_bounds = array<i64: 1, 64>}, {pipeline_mode = #tpu.pipeline_mode<synchronous>, transform_indices = @transform_3, window_bounds = array<i64: 64, 64>}, {pipeline_mode = #tpu.pipeline_mode<synchronous>, transform_indices = @transform_4, window_bounds = array<i64: 1, 64>}, {pipeline_mode = #tpu.pipeline_mode<synchronous>, transform_indices = @transform_5, window_bounds = array<i64: 64, 128>}, {pipeline_mode = #tpu.pipeline_mode<synchronous>, transform_indices = @transform_6, window_bounds = array<i64: 1, 128>}, {transform_indices = @transform_7, window_bounds = array<i64: 8, 128>}]} {
    %c0_i32 = arith.constant 0 : i32
    %0 = arith.cmpi eq, %arg1, %c0_i32 : i32
    %1 = arith.extui %0 : i1 to i32
    %c0_i32_0 = arith.constant 0 : i32
    %2 = arith.cmpi ne, %1, %c0_i32_0 : i32
    scf.if %2 {
      %cst_26 = arith.constant 0xFF800000 : f32
      %36 = vector.broadcast %cst_26 : f32 to vector<8x128xf32>
      %c0_27 = arith.constant 0 : index
      %c0_28 = arith.constant 0 : index
      %37 = vector.load %arg10[%c0_27, %c0_28] : memref<8x128xf32, #tpu.memory_space<vmem>>, vector<8x128xf32>
      tpu.vector_store %arg10[%c0_27, %c0_28], %36 {strides = array<i32>} : memref<8x128xf32, #tpu.memory_space<vmem>>, vector<8x128xf32>,
    } else {
    }
    %c0 = arith.constant 0 : index
    %c0_1 = arith.constant 0 : index
    %c0_2 = arith.constant 0 : index
    %3 = vector.load %arg2[%c0, %c0_1, %c0_2] : memref<8x8x16xbf16, #tpu.memory_space<vmem>>, vector<8x8x16xbf16>
    %4 = vector.shape_cast %3 : vector<8x8x16xbf16> to vector<64x16xbf16>
    %c0_3 = arith.constant 0 : index
    %c0_4 = arith.constant 0 : index
    %5 = vector.load %arg3[%c0_3, %c0_4] : memref<16x64xbf16, #tpu.memory_space<vmem>>, vector<16x64xbf16>
    %cst = arith.constant dense<0.000000e+00> : vector<64x64xf32>
    %6 = tpu.matmul %4, %5, %cst {dimension_numbers = #tpu.dot_dimension_numbers<[1], [0], [0], [1], [0, 0, 1, 1], [], []>} : vector<64x16xbf16>, vector<16x64xbf16>, vector<64x64xf32> -> vector<64x64xf32>
    %c0_5 = arith.constant 0 : index
    %c0_6 = arith.constant 0 : index
    %7 = vector.load %arg4[%c0_5, %c0_6] : memref<1x64xf32, #tpu.memory_space<vmem>>, vector<1x64xf32>
    %8 = vector.broadcast %7 : vector<1x64xf32> to vector<64x64xf32>
    %9 = arith.addf %6, %8 : vector<64x64xf32>
    %cst_7 = arith.constant 0.000000e+00 : f32
    %10 = vector.broadcast %cst_7 : f32 to vector<64x64xf32>
    %11 = arith.maximumf %9, %10 : vector<64x64xf32>
    %12 = arith.truncf %11 : vector<64x64xf32> to vector<64x64xbf16>
    %c0_8 = arith.constant 0 : index
    %c0_9 = arith.constant 0 : index
    %13 = vector.load %arg5[%c0_8, %c0_9] : memref<64x64xbf16, #tpu.memory_space<vmem>>, vector<64x64xbf16>
    %cst_10 = arith.constant dense<0.000000e+00> : vector<64x64xf32>
    %14 = tpu.matmul %12, %13, %cst_10 {dimension_numbers = #tpu.dot_dimension_numbers<[1], [0], [0], [1], [0, 0, 1, 1], [], []>} : vector<64x64xbf16>, vector<64x64xbf16>, vector<64x64xf32> -> vector<64x64xf32>
    %c0_11 = arith.constant 0 : index
    %c0_12 = arith.constant 0 : index
    %15 = vector.load %arg6[%c0_11, %c0_12] : memref<1x64xf32, #tpu.memory_space<vmem>>, vector<1x64xf32>
    %16 = vector.broadcast %15 : vector<1x64xf32> to vector<64x64xf32>
    %17 = arith.addf %14, %16 : vector<64x64xf32>
    %cst_13 = arith.constant 0.000000e+00 : f32
    %18 = vector.broadcast %cst_13 : f32 to vector<64x64xf32>
    %19 = arith.maximumf %17, %18 : vector<64x64xf32>
    %20 = arith.truncf %19 : vector<64x64xf32> to vector<64x64xbf16>
    %c0_14 = arith.constant 0 : index
    %c0_15 = arith.constant 0 : index
    %21 = vector.load %arg7[%c0_14, %c0_15] : memref<64x128xbf16, #tpu.memory_space<vmem>>, vector<64x128xbf16>
    %cst_16 = arith.constant dense<0.000000e+00> : vector<64x128xf32>
    %22 = tpu.matmul %20, %21, %cst_16 {dimension_numbers = #tpu.dot_dimension_numbers<[1], [0], [0], [1], [0, 0, 1, 1], [], []>} : vector<64x64xbf16>, vector<64x128xbf16>, vector<64x128xf32> -> vector<64x128xf32>
    %c0_17 = arith.constant 0 : index
    %c0_18 = arith.constant 0 : index
    %23 = vector.load %arg8[%c0_17, %c0_18] : memref<1x128xf32, #tpu.memory_space<vmem>>, vector<1x128xf32>
    %24 = vector.broadcast %23 : vector<1x128xf32> to vector<64x128xf32>
    %25 = arith.addf %22, %24 : vector<64x128xf32>
    %cst_19 = arith.constant 0.000000e+00 : f32
    %26 = vector.broadcast %cst_19 : f32 to vector<64x128xf32>
    %27 = arith.maximumf %25, %26 : vector<64x128xf32>
    %c0_20 = arith.constant 0 : index
    %c0_21 = arith.constant 0 : index
    %28 = vector.load %arg10[%c0_20, %c0_21] : memref<8x128xf32, #tpu.memory_space<vmem>>, vector<8x128xf32>
    %29 = vector.shape_cast %27 : vector<64x128xf32> to vector<8x8x128xf32>
    %cst_22 = arith.constant dense<0xFF800000> : vector<8x128xf32>
    %30 = vector.multi_reduction <maximumf>, %29, %cst_22 [1] : vector<8x8x128xf32> to vector<8x128xf32>
    %31 = arith.maximumf %28, %30 : vector<8x128xf32>
    %c0_23 = arith.constant 0 : index
    %c0_24 = arith.constant 0 : index
    %32 = vector.load %arg10[%c0_23, %c0_24] : memref<8x128xf32, #tpu.memory_space<vmem>>, vector<8x128xf32>
    tpu.vector_store %arg10[%c0_23, %c0_24], %31 {strides = array<i32>} : memref<8x128xf32, #tpu.memory_space<vmem>>, vector<8x128xf32>,
    %c1_i32 = arith.constant 1 : i32
    %33 = arith.cmpi eq, %arg1, %c1_i32 : i32
    %34 = arith.extui %33 : i1 to i32
    %c0_i32_25 = arith.constant 0 : i32
    %35 = arith.cmpi ne, %34, %c0_i32_25 : i32
    scf.if %35 {
      %c0_26 = arith.constant 0 : index
      %c0_27 = arith.constant 0 : index
      %36 = vector.load %arg10[%c0_26, %c0_27] : memref<8x128xf32, #tpu.memory_space<vmem>>, vector<8x128xf32>
      %c0_28 = arith.constant 0 : index
      %c0_29 = arith.constant 0 : index
      %37 = vector.load %arg9[%c0_28, %c0_29] : memref<8x128xf32, #tpu.memory_space<vmem>>, vector<8x128xf32>
      tpu.vector_store %arg9[%c0_28, %c0_29], %36 {strides = array<i32>} : memref<8x128xf32, #tpu.memory_space<vmem>>, vector<8x128xf32>,
    } else {
    }
    return
  }
  func.func @transform_0(%arg0: i32, %arg1: i32) -> (i32, i32, i32) {
    %c0_i32 = arith.constant 0 : i32
    %c0_i32_0 = arith.constant 0 : i32
    return %arg0, %arg1, %c0_i32 : i32, i32, i32
  }
  func.func @transform_1(%arg0: i32, %arg1: i32) -> (i32, i32) {
    %c0_i32 = arith.constant 0 : i32
    %c0_i32_0 = arith.constant 0 : i32
    %c0_i32_1 = arith.constant 0 : i32
    return %c0_i32, %c0_i32_0 : i32, i32
  }
  func.func @transform_2(%arg0: i32, %arg1: i32) -> (i32, i32) {
    %c0_i32 = arith.constant 0 : i32
    %c0_i32_0 = arith.constant 0 : i32
    %c0_i32_1 = arith.constant 0 : i32
    return %c0_i32, %c0_i32_0 : i32, i32
  }
  func.func @transform_3(%arg0: i32, %arg1: i32) -> (i32, i32) {
    %c0_i32 = arith.constant 0 : i32
    %c0_i32_0 = arith.constant 0 : i32
    %c0_i32_1 = arith.constant 0 : i32
    return %c0_i32, %c0_i32_0 : i32, i32
  }
  func.func @transform_4(%arg0: i32, %arg1: i32) -> (i32, i32) {
    %c0_i32 = arith.constant 0 : i32
    %c0_i32_0 = arith.constant 0 : i32
    %c0_i32_1 = arith.constant 0 : i32
    return %c0_i32, %c0_i32_0 : i32, i32
  }
  func.func @transform_5(%arg0: i32, %arg1: i32) -> (i32, i32) {
    %c0_i32 = arith.constant 0 : i32
    %c0_i32_0 = arith.constant 0 : i32
    %c0_i32_1 = arith.constant 0 : i32
    return %c0_i32, %c0_i32_0 : i32, i32
  }
  func.func @transform_6(%arg0: i32, %arg1: i32) -> (i32, i32) {
    %c0_i32 = arith.constant 0 : i32
    %c0_i32_0 = arith.constant 0 : i32
    %c0_i32_1 = arith.constant 0 : i32
    return %c0_i32, %c0_i32_0 : i32, i32
  }
  func.func @transform_7(%arg0: i32, %arg1: i32) -> (i32, i32) {
    %c0_i32 = arith.constant 0 : i32
    %c0_i32_0 = arith.constant 0 : i32
    return %arg0, %c0_i32 : i32, i32
  }
}

</mosaic_0001>

<llo_original>
// kernel: tpu_custom_call.1
$region0: #{tpu_custom_call.1}
  #allocation0 [shape = 'u32[]', space=smem, size = 0x4, offset = 0x4, fixed_abs, tag = 'smem constant byte address 0x4 - core index']
  #allocation1 [shape = 'u32[72,128]{1,0:T(1,128)}', space=vmem, size = 0x9000, scoped, tag = 'internal scratch']
  #allocation2 [shape = 'f32[8,128]{1,0:T(8,128)}', space=vmem, size = 0x1000, scoped, tag = 'scratch operand']
  %s0 = inlined_call_operand.hbm [shape: bf16[16,16,16], index: 0, kind: input, shape index: {}]
  %s1 = inlined_call_operand.hbm [shape: bf16[16,64], index: 1, kind: input, shape index: {}]
  %s2 = inlined_call_operand.vmem [shape: f32[1,64], index: 2, kind: input, shape index: {}]
  %s3 = inlined_call_operand.hbm [shape: bf16[64,64], index: 3, kind: input, shape index: {}]
  %s4 = inlined_call_operand.vmem [shape: f32[1,64], index: 4, kind: input, shape index: {}]
  %s5 = inlined_call_operand.hbm [shape: bf16[64,128], index: 5, kind: input, shape index: {}]
  %s6 = inlined_call_operand.vmem [shape: f32[1,128], index: 6, kind: input, shape index: {}]
  %s7 = inlined_call_operand.hbm [shape: f32[16,128], index: 7, kind: output, shape index: {}]
  %s8 = sld [smem:[#allocation0]]
  $region85: #{tpu_custom_call.1} parent=0
    _
  %s10 = ssub.s32 1, %s8
  %s11 = scalar_select 0, %s10, %s8
  $region1: #{tpu_custom_call.1} parent=0
    #allocation3 [shape = 'u8[32768]{0}', space=vmem, size = 0x8000, scoped, tag = 'input window, operand 0']
    #allocation4 [shape = 's32[2]{0}', space=sflag, size = 0x8, scoped, tag = 'scoped memory for tpu_custom_call.1']
    #allocation5 [shape = 's32[2]{0}', space=sflag, size = 0x8, scoped, tag = 'scoped memory for tpu_custom_call.1']
    #allocation6 [shape = 'u8[4096]{0}', space=vmem, size = 0x1000, scoped, tag = 'input window, operand 1, single buffered']
    #allocation7 [shape = 's32[1]{0}', space=sflag, size = 0x4, scoped, tag = 'scoped memory for tpu_custom_call.1']
    #allocation8 [shape = 'u8[16384]{0}', space=vmem, size = 0x4000, scoped, tag = 'input window, operand 3, single buffered']
    #allocation9 [shape = 'u8[16384]{0}', space=vmem, size = 0x4000, scoped, tag = 'input window, operand 5, single buffered']
    #allocation10 [shape = 's32[1]{0}', space=sflag, size = 0x4, scoped, tag = 'scoped memory for tpu_custom_call.1']
    #allocation11 [shape = 'u8[8192]{0}', space=vmem, size = 0x2000, scoped, tag = 'output window, operand 0']
    %12 = vsyncpa [#allocation4], 0
    %s13 = scalar_lea.sflag [#allocation4], 1
    %14 = vsyncpa %s13, 0
    %15 = vsyncpa [#allocation7], 0
    %16 = vsyncpa [#allocation10], 0
    %17 = vsyncpa [#allocation5], 0
    %s18 = scalar_lea.sflag [#allocation5], 1
    %19 = vsyncpa %s18, 0
    loop: start=0, step=1, limit=6
    $region2: #{tpu_custom_call.1} parent=1 // loop_pre_header
      _
    $region3: #{tpu_custom_call.1} parent=1 // loop_header
      %s21 = sphi 0, %s25
      %p22 = scmp.ge.s32.totalorder %s21, 6
      %s28 = sphi 0, %s40
      %s29 = sphi 0, %s36
      %s30 = sphi 0, %s28
      %s31 = sphi 0, %s29
      %s32 = sphi 0, %s30
      %s33 = sphi 0, %s31
      %s45 = sphi 0, %s47
      %s48 = sphi 0, %s45
      %s49 = sphi 0, %s48
      %s65 = sphi 0, %s49
      %s69 = sphi 0, %s69
      %s71 = sphi 0, %s69
      %s72 = sphi 0, %s71
      %s86 = sphi 0, %s72
      %s90 = sphi 0, %s90
      %s92 = sphi 0, %s90
      %s93 = sphi 0, %s92
      %s107 = sphi 0, %s93
      %s111 = sphi 0, %s111
      %s113 = sphi 0, %s111
      %s114 = sphi 0, %s113
      %s128 = sphi 0, %s114
      %s132 = sphi 0, %s132
      %s134 = sphi 0, %s132
      %s135 = sphi 0, %s134
      %s149 = sphi 0, %s135
      %s153 = sphi 0, %s153
      %s155 = sphi 0, %s153
      %s156 = sphi 0, %s155
      %s170 = sphi 0, %s156
      %s174 = sphi 0, %s174
      %s176 = sphi 0, %s174
      %s177 = sphi 0, %s176
      %s191 = sphi 0, %s177
      %s197 = sphi 0, %s199
      %s200 = sphi 0, %s197
      %s201 = sphi 0, %s200
      %s217 = sphi 0, %s201
    $region4: #{tpu_custom_call.1} parent=1 // loop_header_branch
      %24 = sbr.rel (%p22) target = $region8
    $region5: #{tpu_custom_call.1} parent=1 // loop_body
      %s26 = ssub.s32 %s21, 1
      %s27 = ssub.s32 %s21, 2
      %s34 = sadd.s32 1, %s29
      %p35 = scmp.ge.s32.totalorder %s34, 2
      %s36 = scalar_select %p35, 0, %s34
      %s37 = sadd.s32 1, %s28
      %s38 = scalar_select %p35, %s37, %s28
      %p39 = scmp.ge.s32.totalorder %s38, 2
      %s40 = scalar_select %p39, 0, %s38
      %s41 = ssub.s32 %s28, %s40
      %s42 = ssub.s32 %s29, %s36
      %s43 = sor.u32 %s41, %s42
      %p44 = scmp.eq.s32.totalorder %s43, 0
      %s46 = sadd.s32 %s45, 1
      %s47 = scalar_select %p44, %s45, %s46
      %p50 = pneg %p44
      %p51 = scmp.eq.s32.totalorder %s21, 3
      %p52 = por %p50, %p51
      %p53 = scmp.ne.s32.totalorder %s45, %s48
      %p54 = scmp.eq.s32.totalorder %s21, 0
      %p55 = por %p53, %p54
      %p56 = scmp.ne.s32.totalorder %s45, %s48
      %p57 = scmp.eq.s32.totalorder %s26, 3
      %p58 = por %p56, %p57
      %p59 = scmp.ne.s32.totalorder %s48, %s49
      %p60 = scmp.eq.s32.totalorder %s26, 0
      %p61 = por %p59, %p60
      %p62 = scmp.ne.s32.totalorder %s48, %s49
      %p63 = scmp.eq.s32.totalorder %s27, 3
      %p64 = por %p62, %p63
      %p66 = scmp.ne.s32.totalorder %s49, %s65
      %p67 = scmp.eq.s32.totalorder %s27, 0
      %p68 = por %p66, %p67
      %s70 = sadd.s32 %s69, 1
      %p73 = scmp.eq.s32.totalorder %s21, 3
      %p74 = scmp.ne.s32.totalorder %s69, %s71
      %p75 = scmp.eq.s32.totalorder %s21, 0
      %p76 = por %p74, %p75
      %p77 = scmp.ne.s32.totalorder %s69, %s71
      %p78 = scmp.eq.s32.totalorder %s26, 3
      %p79 = por %p77, %p78
      %p80 = scmp.ne.s32.totalorder %s71, %s72
      %p81 = scmp.eq.s32.totalorder %s26, 0
      %p82 = por %p80, %p81
      %p83 = scmp.ne.s32.totalorder %s71, %s72
      %p84 = scmp.eq.s32.totalorder %s27, 3
      %p85 = por %p83, %p84
      %p87 = scmp.ne.s32.totalorder %s72, %s86
      %p88 = scmp.eq.s32.totalorder %s27, 0
      %p89 = por %p87, %p88
      %s91 = sadd.s32 %s90, 1
      %p94 = scmp.eq.s32.totalorder %s21, 3
      %p95 = scmp.ne.s32.totalorder %s90, %s92
      %p96 = scmp.eq.s32.totalorder %s21, 0
      %p97 = por %p95, %p96
      %p98 = scmp.ne.s32.totalorder %s90, %s92
      %p99 = scmp.eq.s32.totalorder %s26, 3
      %p100 = por %p98, %p99
      %p101 = scmp.ne.s32.totalorder %s92, %s93
      %p102 = scmp.eq.s32.totalorder %s26, 0
      %p103 = por %p101, %p102
      %p104 = scmp.ne.s32.totalorder %s92, %s93
      %p105 = scmp.eq.s32.totalorder %s27, 3
      %p106 = por %p104, %p105
      %p108 = scmp.ne.s32.totalorder %s93, %s107
      %p109 = scmp.eq.s32.totalorder %s27, 0
      %p110 = por %p108, %p109
      %s112 = sadd.s32 %s111, 1
      %p115 = scmp.eq.s32.totalorder %s21, 3
      %p116 = scmp.ne.s32.totalorder %s111, %s113
      %p117 = scmp.eq.s32.totalorder %s21, 0
      %p118 = por %p116, %p117
      %p119 = scmp.ne.s32.totalorder %s111, %s113
      %p120 = scmp.eq.s32.totalorder %s26, 3
      %p121 = por %p119, %p120
      %p122 = scmp.ne.s32.totalorder %s113, %s114
      %p123 = scmp.eq.s32.totalorder %s26, 0
      %p124 = por %p122, %p123
      %p125 = scmp.ne.s32.totalorder %s113, %s114
      %p126 = scmp.eq.s32.totalorder %s27, 3
      %p127 = por %p125, %p126
      %p129 = scmp.ne.s32.totalorder %s114, %s128
      %p130 = scmp.eq.s32.totalorder %s27, 0
      %p131 = por %p129, %p130
      %s133 = sadd.s32 %s132, 1
      %p136 = scmp.eq.s32.totalorder %s21, 3
      %p137 = scmp.ne.s32.totalorder %s132, %s134
      %p138 = scmp.eq.s32.totalorder %s21, 0
      %p139 = por %p137, %p138
      %p140 = scmp.ne.s32.totalorder %s132, %s134
      %p141 = scmp.eq.s32.totalorder %s26, 3
      %p142 = por %p140, %p141
      %p143 = scmp.ne.s32.totalorder %s134, %s135
      %p144 = scmp.eq.s32.totalorder %s26, 0
      %p145 = por %p143, %p144
      %p146 = scmp.ne.s32.totalorder %s134, %s135
      %p147 = scmp.eq.s32.totalorder %s27, 3
      %p148 = por %p146, %p147
      %p150 = scmp.ne.s32.totalorder %s135, %s149
      %p151 = scmp.eq.s32.totalorder %s27, 0
      %p152 = por %p150, %p151
      %s154 = sadd.s32 %s153, 1
      %p157 = scmp.eq.s32.totalorder %s21, 3
      %p158 = scmp.ne.s32.totalorder %s153, %s155
      %p159 = scmp.eq.s32.totalorder %s21, 0
      %p160 = por %p158, %p159
      %p161 = scmp.ne.s32.totalorder %s153, %s155
      %p162 = scmp.eq.s32.totalorder %s26, 3
      %p163 = por %p161, %p162
      %p164 = scmp.ne.s32.totalorder %s155, %s156
      %p165 = scmp.eq.s32.totalorder %s26, 0
      %p166 = por %p164, %p165
      %p167 = scmp.ne.s32.totalorder %s155, %s156
      %p168 = scmp.eq.s32.totalorder %s27, 3
      %p169 = por %p167, %p168
      %p171 = scmp.ne.s32.totalorder %s156, %s170
      %p172 = scmp.eq.s32.totalorder %s27, 0
      %p173 = por %p171, %p172
      %s175 = sadd.s32 %s174, 1
      %p178 = scmp.eq.s32.totalorder %s21, 3
      %p179 = scmp.ne.s32.totalorder %s174, %s176
      %p180 = scmp.eq.s32.totalorder %s21, 0
      %p181 = por %p179, %p180
      %p182 = scmp.ne.s32.totalorder %s174, %s176
      %p183 = scmp.eq.s32.totalorder %s26, 3
      %p184 = por %p182, %p183
      %p185 = scmp.ne.s32.totalorder %s176, %s177
      %p186 = scmp.eq.s32.totalorder %s26, 0
      %p187 = por %p185, %p186
      %p188 = scmp.ne.s32.totalorder %s176, %s177
      %p189 = scmp.eq.s32.totalorder %s27, 3
      %p190 = por %p188, %p189
      %p192 = scmp.ne.s32.totalorder %s177, %s191
      %p193 = scmp.eq.s32.totalorder %s27, 0
      %p194 = por %p192, %p193
      %s195 = ssub.s32 %s28, %s40
      %p196 = scmp.eq.s32.totalorder %s195, 0
      %s198 = sadd.s32 %s197, 1
      %s199 = scalar_select %p196, %s197, %s198
      %p202 = pneg %p196
      %p203 = scmp.eq.s32.totalorder %s21, 3
      %p204 = por %p202, %p203
      %p205 = scmp.ne.s32.totalorder %s197, %s200
      %p206 = scmp.eq.s32.totalorder %s21, 0
      %p207 = por %p205, %p206
      %p208 = scmp.ne.s32.totalorder %s197, %s200
      %p209 = scmp.eq.s32.totalorder %s26, 3
      %p210 = por %p208, %p209
      %p211 = scmp.ne.s32.totalorder %s200, %s201
      %p212 = scmp.eq.s32.totalorder %s26, 0
      %p213 = por %p211, %p212
      %p214 = scmp.ne.s32.totalorder %s200, %s201
      %p215 = scmp.eq.s32.totalorder %s27, 3
      %p216 = por %p214, %p215
      %p218 = scmp.ne.s32.totalorder %s201, %s217
      %p219 = scmp.eq.s32.totalorder %s27, 0
      %p220 = por %p218, %p219
      %p221 = scmp.le.s32.totalorder 1, %s21
      %p222 = scmp.lt.s32.totalorder %s21, 5
      %p223 = pnand %p221, %p222
      %p224 = pneg %p223
      // Predicated region
      $region9: #{tpu_custom_call.1} parent=5 // pred_check
        _
      $region10: #{tpu_custom_call.1} parent=5 // pred_check_branch
        %226 = sbr.rel (%p223) target = $region12
      $region11: #{tpu_custom_call.1} parent=5 // pred_region
        %s227 = ssub.s32 %s21, 1
        // Predicated region
        $region13: #{tpu_custom_call.1} parent=11 // pred_check
          %p228 = pneg %p82
        $region14: #{tpu_custom_call.1} parent=11 // pred_check_branch
          %230 = sbr.rel (%p228) target = $region16
        $region15: #{tpu_custom_call.1} parent=11 // pred_region
          %232 = vsyncadd [#allocation7], 0
          %s233 = sshll.u32 %s1, 4
          %s234 = int_to_ptr.hbm [resolvable:$true] %s233
          %s235 = sshll.u32 [#allocation6], 4
          %s236 = int_to_ptr.vmem [resolvable:$true] %s235
          %241 = dma.hbm_to_vmem [thread:$0]  %s234, 128, %s236, [#allocation7], 64, 64, 4
        $region16: #{tpu_custom_call.1} parent=11 // pred_fallthru
          _
        // Predicated region
        $region17: #{tpu_custom_call.1} parent=11 // pred_check
          %p242 = pneg %p103
        $region18: #{tpu_custom_call.1} parent=11 // pred_check_branch
          %244 = sbr.rel (%p242) target = $region20
        $region19: #{tpu_custom_call.1} parent=11 // pred_region
          _
        $region20: #{tpu_custom_call.1} parent=11 // pred_fallthru
          _
        // Predicated region
        $region21: #{tpu_custom_call.1} parent=11 // pred_check
          %p245 = pneg %p124
        $region22: #{tpu_custom_call.1} parent=11 // pred_check_branch
          %247 = sbr.rel (%p245) target = $region24
        $region23: #{tpu_custom_call.1} parent=11 // pred_region
          %249 = vsyncadd [#allocation7], 0
          %s250 = sshll.u32 %s3, 4
          %s251 = int_to_ptr.hbm [resolvable:$true] %s250
          %s252 = sshll.u32 [#allocation8], 4
          %s253 = int_to_ptr.vmem [resolvable:$true] %s252
          %258 = dma.hbm_to_vmem [thread:$0]  %s251, 512, %s253, [#allocation7], 64, 64, 4
        $region24: #{tpu_custom_call.1} parent=11 // pred_fallthru
          _
        // Predicated region
        $region25: #{tpu_custom_call.1} parent=11 // pred_check
          %p259 = pneg %p145
        $region26: #{tpu_custom_call.1} parent=11 // pred_check_branch
          %261 = sbr.rel (%p259) target = $region28
        $region27: #{tpu_custom_call.1} parent=11 // pred_region
          _
        $region28: #{tpu_custom_call.1} parent=11 // pred_fallthru
          _
        // Predicated region
        $region29: #{tpu_custom_call.1} parent=11 // pred_check
          %p262 = pneg %p166
        $region30: #{tpu_custom_call.1} parent=11 // pred_check_branch
          %264 = sbr.rel (%p262) target = $region32
        $region31: #{tpu_custom_call.1} parent=11 // pred_region
          %266 = vsyncadd [#allocation10], 0
          %s267 = sshll.u32 %s5, 4
          %s268 = int_to_ptr.hbm [resolvable:$true] %s267
          %s269 = sshll.u32 [#allocation9], 4
          %s270 = int_to_ptr.vmem [resolvable:$true] %s269
          %275 = dma.hbm_to_vmem [thread:$0]  %s268, 512, %s270, [#allocation10], 64, 64, 4
        $region32: #{tpu_custom_call.1} parent=11 // pred_fallthru
          _
        // Predicated region
        $region33: #{tpu_custom_call.1} parent=11 // pred_check
          %p276 = pneg %p187
        $region34: #{tpu_custom_call.1} parent=11 // pred_check_branch
          %278 = sbr.rel (%p276) target = $region36
        $region35: #{tpu_custom_call.1} parent=11 // pred_region
          _
        $region36: #{tpu_custom_call.1} parent=11 // pred_fallthru
          _
      $region12: #{tpu_custom_call.1} parent=5 // pred_fallthru
        _
      %p279 = scmp.lt.s32.totalorder %s21, 4
      // Predicated region
      $region37: #{tpu_custom_call.1} parent=5 // pred_check
        %p280 = pneg %p279
      $region38: #{tpu_custom_call.1} parent=5 // pred_check_branch
        %282 = sbr.rel (%p280) target = $region40
      $region39: #{tpu_custom_call.1} parent=5 // pred_region
        // Predicated region
        $region41: #{tpu_custom_call.1} parent=39 // pred_check
          %p283 = pneg %p55
        $region42: #{tpu_custom_call.1} parent=39 // pred_check_branch
          %285 = sbr.rel (%p283) target = $region44
        $region43: #{tpu_custom_call.1} parent=39 // pred_region
          %s286 = sand.u32 %s45, 1
          %s287 = scalar_lea.sflag [#allocation4], %s286
          %s288 = sand.u32 %s45, 1
          %s289 = smul.addr %s288, 32
          %s290 = scalar_lea.vmem [#allocation3], %s289
          %s291 = smul.u32 8, %s28
          %293 = vsyncadd %s287, 0
          %s294 = smul.addr %s291, 2
          %s295 = sadd.s32 %s29, %s294
          %s296 = smul.addr %s295, 4
          %s297 = scalar_lea.hbm %s0, %s296
          %s298 = sshll.u32 %s297, 4
          %s299 = int_to_ptr.hbm [resolvable:$true] %s298
          %s300 = sshll.u32 %s290, 4
          %s301 = int_to_ptr.vmem [resolvable:$true] %s300
          %306 = dma.hbm_to_vmem [thread:$0]  %s299, 512, %s301, %s287, 128, 64, 4
        $region44: #{tpu_custom_call.1} parent=39 // pred_fallthru
          _
      $region40: #{tpu_custom_call.1} parent=5 // pred_fallthru
        _
      %p307 = scmp.le.s32.totalorder 1, %s21
      %p308 = scmp.lt.s32.totalorder %s21, 5
      %p309 = pnand %p307, %p308
      %p310 = pneg %p309
      // Predicated region
      $region45: #{tpu_custom_call.1} parent=5 // pred_check
        _
      $region46: #{tpu_custom_call.1} parent=5 // pred_check_branch
        %312 = sbr.rel (%p309) target = $region48
      $region47: #{tpu_custom_call.1} parent=5 // pred_region
        %s313 = ssub.s32 %s21, 1
        %s314 = sand.u32 %s48, 1
        %s315 = scalar_lea.sflag [#allocation4], %s314
        %s316 = sand.u32 %s48, 1
        %s317 = smul.addr %s316, 32
        %s318 = scalar_lea.vmem [#allocation3], %s317
        // Predicated region
        $region49: #{tpu_custom_call.1} parent=47 // pred_check
          %p319 = pneg %p61
        $region50: #{tpu_custom_call.1} parent=47 // pred_check_branch
          %321 = sbr.rel (%p319) target = $region52
        $region51: #{tpu_custom_call.1} parent=47 // pred_region
          %323 = dma.done %s315, 512
        $region52: #{tpu_custom_call.1} parent=47 // pred_fallthru
          _
        // Predicated region
        $region53: #{tpu_custom_call.1} parent=47 // pred_check
          %p324 = pneg %p82
        $region54: #{tpu_custom_call.1} parent=47 // pred_check_branch
          %326 = sbr.rel (%p324) target = $region56
        $region55: #{tpu_custom_call.1} parent=47 // pred_region
          %328 = dma.done [#allocation7], 128
        $region56: #{tpu_custom_call.1} parent=47 // pred_fallthru
          _
        // Predicated region
        $region57: #{tpu_custom_call.1} parent=47 // pred_check
          %p329 = pneg %p124
        $region58: #{tpu_custom_call.1} parent=47 // pred_check_branch
          %331 = sbr.rel (%p329) target = $region60
        $region59: #{tpu_custom_call.1} parent=47 // pred_region
          %333 = dma.done [#allocation7], 512
        $region60: #{tpu_custom_call.1} parent=47 // pred_fallthru
          _
        // Predicated region
        $region61: #{tpu_custom_call.1} parent=47 // pred_check
          %p334 = pneg %p166
        $region62: #{tpu_custom_call.1} parent=47 // pred_check_branch
          %336 = sbr.rel (%p334) target = $region64
        $region63: #{tpu_custom_call.1} parent=47 // pred_region
          %338 = dma.done [#allocation10], 512
        $region64: #{tpu_custom_call.1} parent=47 // pred_fallthru
          _
        %s339 = sand.u32 %s48, 1
        %s340 = scalar_lea.sflag [#allocation4], %s339
        %s341 = sand.u32 %s48, 1
        %s342 = smul.addr %s341, 32
        %s343 = scalar_lea.vmem [#allocation3], %s342
        %p344 = pneg %p61
        %p345 = pneg %p58
        %p346 = pneg %p82
        %p347 = pneg %p79
        %p348 = pneg %p103
        %p349 = pneg %p100
        %p350 = pneg %p124
        %p351 = pneg %p121
        %p352 = pneg %p145
        %p353 = pneg %p142
        %p354 = pneg %p166
        %p355 = pneg %p163
        %p356 = pneg %p187
        %p357 = pneg %p184
        %p358 = pneg %p213
        %p359 = pneg %p210
        %s360 = sand.u32 %s200, 1
        %s361 = scalar_lea.sflag [#allocation5], %s360
        %s362 = sand.u32 %s200, 1
        %s363 = smul.addr %s362, 8
        %s364 = scalar_lea.vmem [#allocation11], %s363
        %s365 = smul.u32 8, %s30
        %p367 = scmp.eq.s32.totalorder %s31, 0
        // Predicated region
        $region65: #{tpu_custom_call.1} parent=47 // pred_check
          %p368 = pneg %p367
        $region66: #{tpu_custom_call.1} parent=47 // pred_check_branch
          %370 = sbr.rel (%p368) target = $region68
        $region67: #{tpu_custom_call.1} parent=47 // pred_region
          %371 = vst [vmem:[#allocation2] sm:$0xff] -inf
        $region68: #{tpu_custom_call.1} parent=47 // pred_fallthru
          _
        %v372 = vld [vmem:[%s318] sm:$0xf]
        %v373 = vld [vmem:[%s318 + $0x4] sm:$0xf]
        %v374 = vld [vmem:[%s318 + $0x8] sm:$0xf]
        %v375 = vld [vmem:[%s318 + $0xc] sm:$0xf]
        %v376 = vld [vmem:[%s318 + $0x10] sm:$0xf]
        %v377 = vld [vmem:[%s318 + $0x14] sm:$0xf]
        %v378 = vld [vmem:[%s318 + $0x18] sm:$0xf]
        %v379 = vld [vmem:[%s318 + $0x1c] sm:$0xf]
        %v380 = vld [vmem:[#allocation6] sm:$0xf]
        %v381 = vld [vmem:[#allocation6 + $0x4] sm:$0xf]
        %v382 = vld [vmem:[%s2] sm:$0x1]
        %v384 = vperm.slane %v382, 0
        %v394 = vunpack.c.l.b16 %v372
        %v395 = vunpack.c.l.b16 %v373
        %v396 = vunpack.c.l.b16 %v374
        %v397 = vunpack.c.l.b16 %v375
        %v398 = vunpack.c.l.b16 %v376
        %v399 = vunpack.c.l.b16 %v377
        %v400 = vunpack.c.l.b16 %v378
        %v401 = vunpack.c.l.b16 %v379
        %v402 = vpack.c.b16 %v395, %v394
        %v403 = vpack.c.b16 %v397, %v396
        %v404 = vpack.c.b16 %v399, %v398
        %v405 = vpack.c.b16 %v401, %v400
        %v408 = vunpack.c.l.b16 %v380
        %v409 = vunpack.c.l.b16 %v381
        %v410 = vpack.c.b16 %v409, %v408
        %vm412 = vcmask 130048
        %v414 = vsel %vm412, %v402, 0
        %v417 = vsel %vm412, %v403, 0
        %v420 = vsel %vm412, %v404, 0
        %v423 = vsel %vm412, %v405, 0
        %425 = vmatpush.bf16.msra.mxu0 0
        %426 = vmatpush.bf16.msra.mxu0 0
        %427 = vmatpush.bf16.msra.mxu0 0
        %428 = vmatpush.bf16.msra.mxu0 0
        %429 = vmatpush.bf16.msra.mxu0 0
        %430 = vmatpush.bf16.msra.mxu0 0
        %431 = vmatpush.bf16.msra.mxu0 0
        %432 = vmatpush.bf16.msra.mxu0 %v410
        %433 = vmatmul.bf16.gmra.mxu0 %v414
        %v434 = vpop.f32.mrf.mxu0
        %v435 = vadd.f32 %v384, %v434
        %v436 = vpop.f32.mrf.mxu0
        %v437 = vadd.f32 %v384, %v436
        %438 = vmatmul.bf16.gmra.mxu0 %v417
        %v439 = vpop.f32.mrf.mxu0
        %v440 = vadd.f32 %v384, %v439
        %v441 = vpop.f32.mrf.mxu0
        %v442 = vadd.f32 %v384, %v441
        %443 = vmatmul.bf16.gmra.mxu0 %v420
        %v444 = vpop.f32.mrf.mxu0
        %v445 = vadd.f32 %v384, %v444
        %v446 = vpop.f32.mrf.mxu0
        %v447 = vadd.f32 %v384, %v446
        %448 = vmatmul.bf16.gmra.mxu0 %v423
        %v449 = vpop.f32.mrf.mxu0
        %v450 = vadd.f32 %v384, %v449
        %v451 = vpop.f32.mrf.mxu0
        %v452 = vadd.f32 %v384, %v451
        %453 = vdwg.mxu0
        %v454 = vmax.f32 %v435, 0.0
        %v455 = vmax.f32 %v437, 0.0
        %v456 = vmax.f32 %v440, 0.0
        %v457 = vmax.f32 %v442, 0.0
        %v458 = vmax.f32 %v445, 0.0
        %v459 = vmax.f32 %v447, 0.0
        %v460 = vmax.f32 %v450, 0.0
        %v461 = vmax.f32 %v452, 0.0
        %v462 = vpack.c.bf16 %v455, %v454
        %v463 = vpack.c.bf16 %v457, %v456
        %v464 = vpack.c.bf16 %v459, %v458
        %v465 = vpack.c.bf16 %v461, %v460
        %v466 = vld [vmem:[#allocation8] sm:$0xf]
        %v467 = vld [vmem:[#allocation8 + $0x4] sm:$0xf]
        %v468 = vld [vmem:[#allocation8 + $0x8] sm:$0xf]
        %v469 = vld [vmem:[#allocation8 + $0xc] sm:$0xf]
        %v470 = vld [vmem:[#allocation8 + $0x10] sm:$0xf]
        %v471 = vld [vmem:[#allocation8 + $0x14] sm:$0xf]
        %v472 = vld [vmem:[#allocation8 + $0x18] sm:$0xf]
        %v473 = vld [vmem:[#allocation8 + $0x1c] sm:$0xf]
        %v474 = vld [vmem:[%s4] sm:$0x1]
        %v476 = vperm.slane %v474, 0
        %v486 = vunpack.c.l.b16 %v466
        %v487 = vunpack.c.l.b16 %v467
        %v488 = vunpack.c.l.b16 %v468
        %v489 = vunpack.c.l.b16 %v469
        %v490 = vunpack.c.l.b16 %v470
        %v491 = vunpack.c.l.b16 %v471
        %v492 = vunpack.c.l.b16 %v472
        %v493 = vunpack.c.l.b16 %v473
        %v494 = vpack.c.b16 %v487, %v486
        %v495 = vpack.c.b16 %v489, %v488
        %v496 = vpack.c.b16 %v491, %v490
        %v497 = vpack.c.b16 %v493, %v492
        %vm502 = vcmask 523264
        %v504 = vsel %vm502, %v462, 0
        %v507 = vsel %vm502, %v463, 0
        %v510 = vsel %vm502, %v464, 0
        %v513 = vsel %vm502, %v465, 0
        %515 = vmatpush.bf16.msra.mxu0 0
        %516 = vmatpush.bf16.msra.mxu0 0
        %517 = vmatpush.bf16.msra.mxu0 0
        %518 = vmatpush.bf16.msra.mxu0 0
        %519 = vmatpush.bf16.msra.mxu0 %v497
        %520 = vmatpush.bf16.msra.mxu0 %v496
        %521 = vmatpush.bf16.msra.mxu0 %v495
        %522 = vmatpush.bf16.msra.mxu0 %v494
        %523 = vmatmul.bf16.gmra.mxu0 %v504
        %v524 = vpop.f32.mrf.mxu0
        %v525 = vadd.f32 %v476, %v524
        %v526 = vpop.f32.mrf.mxu0
        %v527 = vadd.f32 %v476, %v526
        %528 = vmatmul.bf16.gmra.mxu0 %v507
        %v529 = vpop.f32.mrf.mxu0
        %v530 = vadd.f32 %v476, %v529
        %v531 = vpop.f32.mrf.mxu0
        %v532 = vadd.f32 %v476, %v531
        %533 = vmatmul.bf16.gmra.mxu0 %v510
        %v534 = vpop.f32.mrf.mxu0
        %v535 = vadd.f32 %v476, %v534
        %v536 = vpop.f32.mrf.mxu0
        %v537 = vadd.f32 %v476, %v536
        %538 = vmatmul.bf16.gmra.mxu0 %v513
        %v539 = vpop.f32.mrf.mxu0
        %v540 = vadd.f32 %v476, %v539
        %v541 = vpop.f32.mrf.mxu0
        %v542 = vadd.f32 %v476, %v541
        %543 = vdwg.mxu0
        %v544 = vmax.f32 %v525, 0.0
        %v545 = vmax.f32 %v527, 0.0
        %v546 = vmax.f32 %v530, 0.0
        %v547 = vmax.f32 %v532, 0.0
        %v548 = vmax.f32 %v535, 0.0
        %v549 = vmax.f32 %v537, 0.0
        %v550 = vmax.f32 %v540, 0.0
        %v551 = vmax.f32 %v542, 0.0
        %v552 = vpack.c.bf16 %v545, %v544
        %v553 = vpack.c.bf16 %v547, %v546
        %v554 = vpack.c.bf16 %v549, %v548
        %v555 = vpack.c.bf16 %v551, %v550
        %v556 = vld [vmem:[#allocation9] sm:$0xf]
        %v557 = vld [vmem:[#allocation9 + $0x4] sm:$0xf]
        %v558 = vld [vmem:[#allocation9 + $0x8] sm:$0xf]
        %v559 = vld [vmem:[#allocation9 + $0xc] sm:$0xf]
        %v560 = vld [vmem:[#allocation9 + $0x10] sm:$0xf]
        %v561 = vld [vmem:[#allocation9 + $0x14] sm:$0xf]
        %v562 = vld [vmem:[#allocation9 + $0x18] sm:$0xf]
        %v563 = vld [vmem:[#allocation9 + $0x1c] sm:$0xf]
        %v564 = vld [vmem:[%s6] sm:$0x1]
        %v566 = vperm.slane %v564, 0
        %v576 = vunpack.c.l.b16 %v556
        %v577 = vunpack.c.l.b16 %v557
        %v578 = vunpack.c.l.b16 %v558
        %v579 = vunpack.c.l.b16 %v559
        %v580 = vunpack.c.l.b16 %v560
        %v581 = vunpack.c.l.b16 %v561
        %v582 = vunpack.c.l.b16 %v562
        %v583 = vunpack.c.l.b16 %v563
        %v584 = vpack.c.b16 %v577, %v576
        %v585 = vpack.c.b16 %v579, %v578
        %v586 = vpack.c.b16 %v581, %v580
        %v587 = vpack.c.b16 %v583, %v582
        %v593 = vsel %vm502, %v552, 0
        %v596 = vsel %vm502, %v553, 0
        %v599 = vsel %vm502, %v554, 0
        %v602 = vsel %vm502, %v555, 0
        %604 = vmatpush.bf16.msra.mxu0 0
        %605 = vmatpush.bf16.msra.mxu0 0
        %606 = vmatpush.bf16.msra.mxu0 0
        %607 = vmatpush.bf16.msra.mxu0 0
        %608 = vmatpush.bf16.msra.mxu0 %v587
        %609 = vmatpush.bf16.msra.mxu0 %v586
        %610 = vmatpush.bf16.msra.mxu0 %v585
        %611 = vmatpush.bf16.msra.mxu0 %v584
        %612 = vmatmul.bf16.gmra.mxu0 %v593
        %v613 = vpop.f32.mrf.mxu0
        %v614 = vadd.f32 %v566, %v613
        %v615 = vpop.f32.mrf.mxu0
        %v616 = vadd.f32 %v566, %v615
        %617 = vmatmul.bf16.gmra.mxu0 %v596
        %v618 = vpop.f32.mrf.mxu0
        %v619 = vadd.f32 %v566, %v618
        %v620 = vpop.f32.mrf.mxu0
        %v621 = vadd.f32 %v566, %v620
        %622 = vmatmul.bf16.gmra.mxu0 %v599
        %v623 = vpop.f32.mrf.mxu0
        %v624 = vadd.f32 %v566, %v623
        %v625 = vpop.f32.mrf.mxu0
        %v626 = vadd.f32 %v566, %v625
        %627 = vmatmul.bf16.gmra.mxu0 %v602
        %v628 = vpop.f32.mrf.mxu0
        %v629 = vadd.f32 %v566, %v628
        %v630 = vpop.f32.mrf.mxu0
        %v631 = vadd.f32 %v566, %v630
        %632 = vdwg.mxu0
        %v633 = vmax.f32 %v614, 0.0
        %v634 = vmax.f32 %v616, 0.0
        %v635 = vmax.f32 %v619, 0.0
        %v636 = vmax.f32 %v621, 0.0
        %v637 = vmax.f32 %v624, 0.0
        %v638 = vmax.f32 %v626, 0.0
        %v639 = vmax.f32 %v629, 0.0
        %v640 = vmax.f32 %v631, 0.0
        %v641 = vld [vmem:[#allocation2] sm:$0xff]
        %v642 = vrot.slane %v633, 4
        %v643 = vmax.f32 %v633, %v642
        %v644 = vrot.slane %v643, 2
        %v645 = vmax.f32 %v643, %v644
        %v646 = vrot.slane %v645, 1
        %v647 = vmax.f32 %v645, %v646
        %v648 = vrot.slane %v634, 4
        %v649 = vmax.f32 %v634, %v648
        %v650 = vrot.slane %v649, 2
        %v651 = vmax.f32 %v649, %v650
        %v652 = vrot.slane %v651, 1
        %v653 = vmax.f32 %v651, %v652
        %v654 = vrot.slane %v635, 4
        %v655 = vmax.f32 %v635, %v654
        %v656 = vrot.slane %v655, 2
        %v657 = vmax.f32 %v655, %v656
        %v658 = vrot.slane %v657, 1
        %v659 = vmax.f32 %v657, %v658
        %v660 = vrot.slane %v636, 4
        %v661 = vmax.f32 %v636, %v660
        %v662 = vrot.slane %v661, 2
        %v663 = vmax.f32 %v661, %v662
        %v664 = vrot.slane %v663, 1
        %v665 = vmax.f32 %v663, %v664
        %v666 = vrot.slane %v637, 4
        %v667 = vmax.f32 %v637, %v666
        %v668 = vrot.slane %v667, 2
        %v669 = vmax.f32 %v667, %v668
        %v670 = vrot.slane %v669, 1
        %v671 = vmax.f32 %v669, %v670
        %v672 = vrot.slane %v638, 4
        %v673 = vmax.f32 %v638, %v672
        %v674 = vrot.slane %v673, 2
        %v675 = vmax.f32 %v673, %v674
        %v676 = vrot.slane %v675, 1
        %v677 = vmax.f32 %v675, %v676
        %v678 = vrot.slane %v639, 4
        %v679 = vmax.f32 %v639, %v678
        %v680 = vrot.slane %v679, 2
        %v681 = vmax.f32 %v679, %v680
        %v682 = vrot.slane %v681, 1
        %v683 = vmax.f32 %v681, %v682
        %v684 = vrot.slane %v640, 4
        %v685 = vmax.f32 %v640, %v684
        %v686 = vrot.slane %v685, 2
        %v687 = vmax.f32 %v685, %v686
        %v688 = vrot.slane %v687, 1
        %v689 = vmax.f32 %v687, %v688
        %vm698 = vcmask 1041409
        %v699 = vsel %vm698, %v653, %v647
        %vm700 = vcmask 1042434
        %v701 = vsel %vm700, %v659, %v699
        %vm702 = vcmask 1043459
        %v703 = vsel %vm702, %v665, %v701
        %vm704 = vcmask 1044484
        %v705 = vsel %vm704, %v671, %v703
        %vm706 = vcmask 1045509
        %v707 = vsel %vm706, %v677, %v705
        %vm708 = vcmask 1046534
        %v709 = vsel %vm708, %v683, %v707
        %vm710 = vcmask 1047559
        %v711 = vsel %vm710, %v689, %v709
        %v713 = vmax.f32 %v641, %v711
        %714 = vst [vmem:[#allocation2] sm:$0xff] %v713
        %p715 = scmp.eq.s32.totalorder %s31, 1
        // Predicated region
        $region69: #{tpu_custom_call.1} parent=47 // pred_check
          %p716 = pneg %p715
        $region70: #{tpu_custom_call.1} parent=47 // pred_check_branch
          %718 = sbr.rel (%p716) target = $region72
        $region71: #{tpu_custom_call.1} parent=47 // pred_region
          %v719 = vld [vmem:[#allocation2] sm:$0xff]
          %720 = vst [vmem:[%s364] sm:$0xff] %v719
        $region72: #{tpu_custom_call.1} parent=47 // pred_fallthru
          _
        %s721 = sand.u32 %s200, 1
        %s722 = scalar_lea.sflag [#allocation5], %s721
        %s723 = sand.u32 %s200, 1
        %s724 = smul.addr %s723, 8
        %s725 = scalar_lea.vmem [#allocation11], %s724
        // Predicated region
        $region73: #{tpu_custom_call.1} parent=47 // pred_check
          %p726 = pneg %p210
        $region74: #{tpu_custom_call.1} parent=47 // pred_check_branch
          %728 = sbr.rel (%p726) target = $region76
        $region75: #{tpu_custom_call.1} parent=47 // pred_region
          %730 = vsyncadd %s722, 0
          %s731 = smul.addr %s30, 8
          %s732 = scalar_lea.hbm %s7, %s731
          %s734 = sshll.u32 %s725, 4
          %s735 = int_to_ptr.vmem [resolvable:$true] %s734
          %s736 = sshll.u32 %s732, 4
          %s737 = int_to_ptr.hbm [resolvable:$true] %s736
          %739 = dma.vmem_to_hbm [thread:$0]  %s735, 128, %s737, %s722
        $region76: #{tpu_custom_call.1} parent=47 // pred_fallthru
          _
      $region48: #{tpu_custom_call.1} parent=5 // pred_fallthru
        _
      %p740 = scmp.le.s32.totalorder 2, %s21
      // Predicated region
      $region77: #{tpu_custom_call.1} parent=5 // pred_check
        %p741 = pneg %p740
      $region78: #{tpu_custom_call.1} parent=5 // pred_check_branch
        %743 = sbr.rel (%p741) target = $region80
      $region79: #{tpu_custom_call.1} parent=5 // pred_region
        %s744 = ssub.s32 %s21, 2
        // Predicated region
        $region81: #{tpu_custom_call.1} parent=79 // pred_check
          %p745 = pneg %p216
        $region82: #{tpu_custom_call.1} parent=79 // pred_check_branch
          %747 = sbr.rel (%p745) target = $region84
        $region83: #{tpu_custom_call.1} parent=79 // pred_region
          %s748 = sand.u32 %s201, 1
          %s749 = scalar_lea.sflag [#allocation5], %s748
          %s750 = sand.u32 %s201, 1
          %s751 = smul.addr %s750, 8
          %s752 = scalar_lea.vmem [#allocation11], %s751
          %754 = dma.done %s749, 128
        $region84: #{tpu_custom_call.1} parent=79 // pred_fallthru
          _
      $region80: #{tpu_custom_call.1} parent=5 // pred_fallthru
        _
    $region6: #{tpu_custom_call.1} parent=1 // loop_footer
      %s25 = sadd.s32 1, %s21
    $region7: #{tpu_custom_call.1} parent=1 // loop_footer_branch
      %20 = sbr.rel target = $region3
    $region8: #{tpu_custom_call.1} parent=1 // loop_exit
      _
    %755 = vsyncpa [#allocation4], 1
    %s756 = scalar_lea.sflag [#allocation4], 1
    %757 = vsyncpa %s756, 1
    %758 = vsyncpa [#allocation7], 1
    %759 = vsyncpa [#allocation10], 1
    %760 = vsyncpa [#allocation5], 1
    %s761 = scalar_lea.sflag [#allocation5], 1
    %762 = vsyncpa %s761, 1

</llo_original>
